<compile_context>
chip_gen: v7x
topology: tpu7x:2x2x1
jax: 0.10.0
libtpu: 0.0.40
codegen_flags: <defaults>
</compile_context>

<pallas_src>
import functools

import jax
import jax.numpy as jnp
from jax.experimental import pallas as pl
from jax.experimental.pallas import tpu as pltpu


def _label_smoothing_kernel(pred_ref, tgt_ref, out_ref, acc_ref, *,
                            classes, smoothing, n_total, tile_rows):
    # pred_ref: (TILE_N, C) native dtype in VMEM
    # tgt_ref : (TILE_N, 1) int32 in VMEM
    # out_ref : (1, 1) f32 in VMEM (scalar loss, written once at the last step)
    # acc_ref : (1, 1) f32 VMEM scratch (running sum of per-row losses)
    i = pl.program_id(0)

    @pl.when(i == 0)
    def _init():
        acc_ref[...] = jnp.zeros_like(acc_ref)

    x = pred_ref[...].astype(jnp.float32)              # single upcast after load
    tn, c = x.shape

    # Global row indices -> mask rows that fall beyond the real N (last tile).
    row = jax.lax.broadcasted_iota(jnp.int32, (tn, 1), 0) + i * tile_rows
    valid = row < n_total                               # (TILE_N, 1) bool
    x = jnp.where(valid, x, 0.0)                        # neutralize pad/garbage rows

    # --- stable log-softmax pieces (no full logp materialization) ---
    m = jnp.max(x, axis=-1, keepdims=True)              # (TILE_N, 1)
    z = x - m                                           # (TILE_N, C)
    lse = jnp.log(jnp.sum(jnp.exp(z), axis=-1, keepdims=True))   # (TILE_N, 1)
    sum_z = jnp.sum(z, axis=-1, keepdims=True)                    # (TILE_N, 1)

    # z at the target class, via a masked row-sum (no gather, no true_dist).
    tgt = tgt_ref[...]                                   # (TILE_N, 1) int32
    col = jax.lax.broadcasted_iota(jnp.int32, (tn, c), 1)
    z_tgt = jnp.sum(jnp.where(col == tgt, z, 0.0), axis=-1, keepdims=True)

    confidence = jnp.float32(1.0 - smoothing)
    smooth_val = jnp.float32(smoothing / (classes - 1))

    # per_row = sum_c(-true_dist * logp), algebraically simplified.
    per_row = (-smooth_val * (sum_z - jnp.float32(c) * lse)
               - (confidence - smooth_val) * (z_tgt - lse))       # (TILE_N, 1)
    per_row = jnp.where(valid, per_row, 0.0)

    acc_ref[...] = acc_ref[...] + jnp.sum(per_row)

    @pl.when(i == pl.num_programs(0) - 1)
    def _finalize():
        out_ref[...] = acc_ref[...] * jnp.float32(1.0 / n_total)


def label_smoothing_loss(pred, target, *, classes, smoothing=0.0,
                         max_tile_rows=512):
    """pred: (N, C) float (f32/bf16), target: (N,) int. Returns scalar f32 loss."""
    n, c = pred.shape
    assert c == classes, (c, classes)
    assert classes >= 2, "smoothing / (classes - 1) requires classes >= 2"
    tgt2d = target.astype(jnp.int32).reshape(n, 1)

    # --- choose the row tile: as big as comfortably fits VMEM (v7x = 64 MiB) ---
    itemsize = pred.dtype.itemsize
    max_tile_rows = max(8, (int(max_tile_rows) // 8) * 8)
    target_tile_bytes = 8 << 20                            # ~8 MiB per input buffer
    rows_for_budget = (target_tile_bytes // max(1, c * itemsize)) // 8 * 8
    tile_rows = int(max(8, min(max_tile_rows, rows_for_budget)))
    if tile_rows >= n:
        tile_rows = n                                      # single full block (always legal)
    num_tiles = pl.cdiv(n, tile_rows)

    kernel = functools.partial(
        _label_smoothing_kernel,
        classes=classes, smoothing=float(smoothing),
        n_total=n, tile_rows=tile_rows)

    # Double-buffered pred + target tiles, plus headroom; stay well under 64 MiB.
    vmem_needed = 2 * tile_rows * (c * itemsize + 4) + (1 << 20)
    vmem_limit = int(min(max(vmem_needed, 32 << 20), 60 << 20))

    out = pl.pallas_call(
        kernel,
        out_shape=jax.ShapeDtypeStruct((1, 1), jnp.float32),
        grid=(num_tiles,),
        in_specs=[
            pl.BlockSpec((tile_rows, c), lambda i: (i, 0)),   # pred tile
            pl.BlockSpec((tile_rows, 1), lambda i: (i, 0)),   # target tile
        ],
        out_specs=pl.BlockSpec((1, 1), lambda i: (0, 0)),     # resident accumulator output
        scratch_shapes=[pltpu.VMEM((1, 1), jnp.float32)],
        compiler_params=pltpu.CompilerParams(
            dimension_semantics=("arbitrary",),               # reduction axis
            vmem_limit_bytes=vmem_limit,
        ),
    )(pred, tgt2d)
    return out[0, 0]


def _reference(pred, target, classes, smoothing):
    # pure-JAX reference mirroring the PyTorch module
    logp = jax.nn.log_softmax(pred.astype(jnp.float32), axis=-1)
    confidence = 1.0 - smoothing
    smooth_val = smoothing / (classes - 1)
    true_dist = jnp.full_like(logp, smooth_val)
    true_dist = true_dist.at[jnp.arange(pred.shape[0]), target].set(confidence)
    return jnp.mean(jnp.sum(-true_dist * logp, axis=-1))


if __name__ == "__main__":
    key = jax.random.PRNGKey(0)
    smoothing = 0.1

    # --- Test 1: small f32, single full block (matches module demo scale) ---
    N, C = 8, 32
    k1, k2, k3, k4, k5, k6 = jax.random.split(key, 6)
    pred = jax.random.normal(k1, (N, C), dtype=jnp.float32)
    target = jax.random.randint(k2, (N,), 0, C, dtype=jnp.int32)
    loss = jax.block_until_ready(
        label_smoothing_loss(pred, target, classes=C, smoothing=smoothing))
    ref = _reference(pred, target, C, smoothing)
    assert jnp.allclose(loss, ref, atol=1e-5, rtol=1e-5), (loss, ref)

    # --- Test 2: multi-tile grid with a partial last tile (N % TILE_N != 0) ---
    N2, C2 = 200, 128
    pred2 = jax.random.normal(k3, (N2, C2), dtype=jnp.float32)
    target2 = jax.random.randint(k4, (N2,), 0, C2, dtype=jnp.int32)
    loss2 = jax.block_until_ready(
        label_smoothing_loss(pred2, target2, classes=C2, smoothing=smoothing,
                             max_tile_rows=64))
    ref2 = _reference(pred2, target2, C2, smoothing)
    assert jnp.allclose(loss2, ref2, atol=1e-5, rtol=1e-5), (loss2, ref2)

    # --- Test 3: bf16 input streamed natively (halved HBM bytes) ---
    N3, C3 = 16, 128
    pred3 = jax.random.normal(k5, (N3, C3), dtype=jnp.float32).astype(jnp.bfloat16)
    target3 = jax.random.randint(k6, (N3,), 0, C3, dtype=jnp.int32)
    loss3 = jax.block_until_ready(
        label_smoothing_loss(pred3, target3, classes=C3, smoothing=smoothing))
    ref3 = _reference(pred3.astype(jnp.float32), target3, C3, smoothing)
    assert jnp.allclose(loss3, ref3, atol=1e-3, rtol=1e-3), (loss3, ref3)

    print("KERNEL_OK")
</pallas_src>

<mosaic_0001>
module attributes {stable_mosaic.version = 11 : i64} {
  func.func @_label_smoothing_kernel(%arg0: i32, %arg1: memref<8x32xf32, #tpu.memory_space<vmem>>, %arg2: memref<8x1xi32, #tpu.memory_space<vmem>>, %arg3: memref<1x1xf32, #tpu.memory_space<vmem>>, %arg4: memref<1x1xf32, #tpu.memory_space<vmem>>) attributes {dimension_semantics = [#tpu.dimension_semantics<arbitrary>], iteration_bounds = array<i64: 1>, scalar_prefetch = 0 : i64, scratch_operands = 1 : i64, tpu.core_type = #tpu.core_type<tc>, window_params = [{transform_indices = @transform_0, window_bounds = array<i64: 8, 32>}, {transform_indices = @transform_1, window_bounds = array<i64: 8, 1>}, {pipeline_mode = #tpu.pipeline_mode<synchronous>, transform_indices = @transform_2, window_bounds = array<i64: 1, 1>}]} {
    %c0_i32 = arith.constant 0 : i32
    %0 = arith.cmpi eq, %arg0, %c0_i32 : i32
    %1 = arith.extui %0 : i1 to i32
    %c0_i32_0 = arith.constant 0 : i32
    %2 = arith.cmpi ne, %1, %c0_i32_0 : i32
    scf.if %2 {
      %cst_23 = arith.constant 0.000000e+00 : f32
      %56 = vector.broadcast %cst_23 : f32 to vector<1x1xf32>
      %c0_24 = arith.constant 0 : index
      %c0_25 = arith.constant 0 : index
      %57 = vector.load %arg4[%c0_24, %c0_25] : memref<1x1xf32, #tpu.memory_space<vmem>>, vector<1x1xf32>
      tpu.vector_store %arg4[%c0_24, %c0_25], %56 {strides = array<i32>} : memref<1x1xf32, #tpu.memory_space<vmem>>, vector<1x1xf32>,
    } else {
    }
    %c0 = arith.constant 0 : index
    %c0_1 = arith.constant 0 : index
    %3 = vector.load %arg1[%c0, %c0_1] : memref<8x32xf32, #tpu.memory_space<vmem>>, vector<8x32xf32>
    %4 = tpu.iota {dimensions = array<i32: 0>} : vector<8x1xi32>
    %c8_i32 = arith.constant 8 : i32
    %5 = arith.muli %arg0, %c8_i32 : i32
    %6 = vector.broadcast %5 : i32 to vector<8x1xi32>
    %7 = arith.addi %4, %6 : vector<8x1xi32>
    %c8_i32_2 = arith.constant 8 : i32
    %8 = vector.broadcast %c8_i32_2 : i32 to vector<8x1xi32>
    %9 = arith.cmpi slt, %7, %8 : vector<8x1xi32>
    %cst = arith.constant 0.000000e+00 : f32
    %10 = vector.shape_cast %9 : vector<8x1xi1> to vector<8x1xi1>
    %11 = vector.broadcast %10 : vector<8x1xi1> to vector<8x32xi1>
    %12 = vector.broadcast %cst : f32 to vector<8x32xf32>
    %13 = arith.select %11, %3, %12 : vector<8x32xi1>, vector<8x32xf32>
    %cst_3 = arith.constant dense<0xFF800000> : vector<8xf32>
    %14 = vector.multi_reduction <maximumf>, %13, %cst_3 [1] : vector<8x32xf32> to vector<8xf32>
    %15 = vector.shape_cast %14 : vector<8xf32> to vector<8x1xf32>
    %16 = vector.broadcast %15 : vector<8x1xf32> to vector<8x32xf32>
    %17 = arith.subf %13, %16 : vector<8x32xf32>
    %18 = math.exp %17 : vector<8x32xf32>
    %cst_4 = arith.constant dense<0.000000e+00> : vector<8xf32>
    %19 = vector.multi_reduction <add>, %18, %cst_4 [1] : vector<8x32xf32> to vector<8xf32>
    %20 = vector.shape_cast %19 : vector<8xf32> to vector<8x1xf32>
    %21 = math.log %20 : vector<8x1xf32>
    %cst_5 = arith.constant dense<0.000000e+00> : vector<8xf32>
    %22 = vector.multi_reduction <add>, %17, %cst_5 [1] : vector<8x32xf32> to vector<8xf32>
    %23 = vector.shape_cast %22 : vector<8xf32> to vector<8x1xf32>
    %c0_6 = arith.constant 0 : index
    %c0_7 = arith.constant 0 : index
    %24 = vector.load %arg2[%c0_6, %c0_7] : memref<8x1xi32, #tpu.memory_space<vmem>>, vector<8x1xi32>
    %25 = tpu.iota {dimensions = array<i32: 1>} : vector<8x32xi32>
    %26 = vector.broadcast %24 : vector<8x1xi32> to vector<8x32xi32>
    %27 = arith.cmpi eq, %25, %26 : vector<8x32xi32>
    %cst_8 = arith.constant 0.000000e+00 : f32
    %28 = vector.broadcast %cst_8 : f32 to vector<8x32xf32>
    %29 = arith.select %27, %17, %28 : vector<8x32xi1>, vector<8x32xf32>
    %cst_9 = arith.constant dense<0.000000e+00> : vector<8xf32>
    %30 = vector.multi_reduction <add>, %29, %cst_9 [1] : vector<8x32xf32> to vector<8xf32>
    %31 = vector.shape_cast %30 : vector<8xf32> to vector<8x1xf32>
    %cst_10 = arith.constant 0.000000e+00 : f32
    %cst_11 = arith.constant 0.0032258064 : f32
    %32 = arith.subf %cst_10, %cst_11 : f32
    %cst_12 = arith.constant 3.200000e+01 : f32
    %33 = vector.broadcast %cst_12 : f32 to vector<8x1xf32>
    %34 = arith.mulf %33, %21 : vector<8x1xf32>
    %35 = arith.subf %23, %34 : vector<8x1xf32>
    %36 = vector.broadcast %32 : f32 to vector<8x1xf32>
    %37 = arith.mulf %36, %35 : vector<8x1xf32>
    %cst_13 = arith.constant 0.899999976 : f32
    %cst_14 = arith.constant 0.0032258064 : f32
    %38 = arith.subf %cst_13, %cst_14 : f32
    %39 = arith.subf %31, %21 : vector<8x1xf32>
    %40 = vector.broadcast %38 : f32 to vector<8x1xf32>
    %41 = arith.mulf %40, %39 : vector<8x1xf32>
    %42 = arith.subf %37, %41 : vector<8x1xf32>
    %cst_15 = arith.constant 0.000000e+00 : f32
    %43 = vector.broadcast %cst_15 : f32 to vector<8x1xf32>
    %44 = arith.select %9, %42, %43 : vector<8x1xi1>, vector<8x1xf32>
    %c0_16 = arith.constant 0 : index
    %c0_17 = arith.constant 0 : index
    %45 = vector.load %arg4[%c0_16, %c0_17] : memref<1x1xf32, #tpu.memory_space<vmem>>, vector<1x1xf32>
    %46 = vector.shape_cast %44 : vector<8x1xf32> to vector<1x8x1xf32>
    %cst_18 = arith.constant dense<0.000000e+00> : vector<1xf32>
    %47 = vector.multi_reduction <add>, %46, %cst_18 [1, 2] : vector<1x8x1xf32> to vector<1xf32>
    %48 = vector.shape_cast %47 : vector<1xf32> to vector<1x1x1xf32>
    %49 = vector.extract %48[0, 0, 0] : f32 from vector<1x1x1xf32>
    %50 = vector.broadcast %49 : f32 to vector<1x1xf32>
    %51 = arith.addf %45, %50 : vector<1x1xf32>
    %c0_19 = arith.constant 0 : index
    %c0_20 = arith.constant 0 : index
    %52 = vector.load %arg4[%c0_19, %c0_20] : memref<1x1xf32, #tpu.memory_space<vmem>>, vector<1x1xf32>
    tpu.vector_store %arg4[%c0_19, %c0_20], %51 {strides = array<i32>} : memref<1x1xf32, #tpu.memory_space<vmem>>, vector<1x1xf32>,
    %c0_i32_21 = arith.constant 0 : i32
    %53 = arith.cmpi eq, %arg0, %c0_i32_21 : i32
    %54 = arith.extui %53 : i1 to i32
    %c0_i32_22 = arith.constant 0 : i32
    %55 = arith.cmpi ne, %54, %c0_i32_22 : i32
    scf.if %55 {
      %c0_23 = arith.constant 0 : index
      %c0_24 = arith.constant 0 : index
      %56 = vector.load %arg4[%c0_23, %c0_24] : memref<1x1xf32, #tpu.memory_space<vmem>>, vector<1x1xf32>
      %cst_25 = arith.constant 1.250000e-01 : f32
      %57 = vector.broadcast %cst_25 : f32 to vector<1x1xf32>
      %58 = arith.mulf %56, %57 : vector<1x1xf32>
      %c0_26 = arith.constant 0 : index
      %c0_27 = arith.constant 0 : index
      %59 = vector.load %arg3[%c0_26, %c0_27] : memref<1x1xf32, #tpu.memory_space<vmem>>, vector<1x1xf32>
      tpu.vector_store %arg3[%c0_26, %c0_27], %58 {strides = array<i32>} : memref<1x1xf32, #tpu.memory_space<vmem>>, vector<1x1xf32>,
    } else {
    }
    return
  }
  func.func @transform_0(%arg0: i32) -> (i32, i32) {
    %c0_i32 = arith.constant 0 : i32
    %c0_i32_0 = arith.constant 0 : i32
    return %arg0, %c0_i32 : i32, i32
  }
  func.func @transform_1(%arg0: i32) -> (i32, i32) {
    %c0_i32 = arith.constant 0 : i32
    %c0_i32_0 = arith.constant 0 : i32
    return %arg0, %c0_i32 : i32, i32
  }
  func.func @transform_2(%arg0: i32) -> (i32, i32) {
    %c0_i32 = arith.constant 0 : i32
    %c0_i32_0 = arith.constant 0 : i32
    %c0_i32_1 = arith.constant 0 : i32
    return %c0_i32, %c0_i32_0 : i32, i32
  }
}

</mosaic_0001>

<llo_original>
// kernel: tpu_custom_call.1
$region0: #{tpu_custom_call.1}
  #allocation0 [shape = 'u32[]', space=smem, size = 0x4, offset = 0x4, fixed_abs, tag = 'smem constant byte address 0x4 - core index']
  #allocation1 [shape = 'u32[144,128]{1,0:T(1,128)}', space=vmem, size = 0x12000, scoped, tag = 'internal scratch']
  #allocation2 [shape = 'f32[1,1]{1,0:T(1,128)}', space=vmem, size = 0x200, scoped, tag = 'scratch operand']
  %s0 = inlined_call_operand.vmem [shape: f32[8,32], index: 0, kind: input, shape index: {}]
  %s1 = inlined_call_operand.vmem [shape: s32[8,1], index: 1, kind: input, shape index: {}]
  %s2 = inlined_call_operand.hbm [shape: f32[1,1], index: 2, kind: output, shape index: {}]
  %s3 = sld [smem:[#allocation0]]
  $region26: #{tpu_custom_call.1} parent=0
    _
  %s5 = ssub.s32 1, %s3
  %s6 = scalar_select 0, %s5, %s3
  $region1: #{tpu_custom_call.1} parent=0
    #allocation3 [shape = 'u8[512]{0}', space=vmem, size = 0x400, scoped, tag = 'output window, operand 0, single buffered']
    #allocation4 [shape = 's32[1]{0}', space=sflag, size = 0x4, scoped, tag = 'scoped memory for tpu_custom_call.1']
    %7 = vsyncpa [#allocation4], 0
    // Predicated region
    $region2: #{tpu_custom_call.1} parent=1 // pred_check
      _
    $region3: #{tpu_custom_call.1} parent=1 // pred_check_branch
      %9 = sbr.rel (0) target = $region5
    $region4: #{tpu_custom_call.1} parent=1 // pred_region
      _
    $region5: #{tpu_custom_call.1} parent=1 // pred_fallthru
      _
    // Predicated region
    $region6: #{tpu_custom_call.1} parent=1 // pred_check
      _
    $region7: #{tpu_custom_call.1} parent=1 // pred_check_branch
      %11 = sbr.rel (0) target = $region9
    $region8: #{tpu_custom_call.1} parent=1 // pred_region
      _
    $region9: #{tpu_custom_call.1} parent=1 // pred_fallthru
      _
    %p12 = scmp.eq.s32.totalorder 0, 0
    // Predicated region
    $region10: #{tpu_custom_call.1} parent=1 // pred_check
      %p13 = pneg %p12
    $region11: #{tpu_custom_call.1} parent=1 // pred_check_branch
      %15 = sbr.rel (%p13) target = $region13
    $region12: #{tpu_custom_call.1} parent=1 // pred_region
      %vm16 = vcmask 0
      %17 = vst.msk [vmem:[#allocation2] sm:$0x1] %vm16, 0.0
    $region13: #{tpu_custom_call.1} parent=1 // pred_fallthru
      _
    %v18 = vld [vmem:[%s0] sm:$0xff]
    %v19 = vlaneseq
    %v20 = vshrl.u32 %v19, 7
    %s21 = smul.u32 0, 8
    %v22 = vstv %s21
    %v23 = vadd.s32 %v20, %v22
    %vm24 = vcmp.lt.s32.totalorder %v23, 8
    %v25 = vsel %vm24, 1, 0
    %vm26 = vcmp.eq.s32.totalorder %v25, 1
    %v27 = vsel %vm26, %v18, 0.0
    %vm28 = vcmask 261120
    %v29 = vsel %vm28, %v27, -inf
    %30 = vmax.xlane.f32.xlu0 %v29
    %v31 = vpop.xlane.xlu0 %30
    %v32 = vsub.f32 %v27, %v31
    %v33 = vmul.f32 %v32, 1.442695
    %v34 = vpow.pop %v33
    %v35 = vsel %vm28, %v34, 0.0
    %36 = vadd.xlane.f32.xlu0 %v35
    %v37 = vpop.xlane.xlu0 %36
    %v38 = vlog2.pop %v37
    %v39 = vmul.f32 %v38, 0.6931472
    %v40 = vsel %vm28, %v32, 0.0
    %41 = vadd.xlane.f32.xlu0 %v40
    %v42 = vpop.xlane.xlu0 %41
    %v43 = vld [vmem:[%s1] sm:$0xff]
    %v44 = vlaneseq
    %v45 = vand.u32 %v44, 127
    %46 = vset.pattern.permute.xlu0 0
    %47 = vperm.xlu0 %46, %v43
    %v48 = vpop.permute.xlu0 %47
    %vm49 = vcmp.eq.s32.totalorder %v45, %v48
    %v50 = vsel %vm49, %v32, 0.0
    %v51 = vsel %vm28, %v50, 0.0
    %52 = vadd.xlane.f32.xlu0 %v51
    %v53 = vpop.xlane.xlu0 %52
    %v54 = vmul.f32 %v39, 32.0
    %v55 = vsub.f32 %v42, %v54
    %v56 = vmul.f32 %v55, -0.0032258064
    %v57 = vsub.f32 %v53, %v39
    %v58 = vmul.f32 %v57, 0.8967742
    %v59 = vsub.f32 %v56, %v58
    %v60 = vsel %vm24, %v59, 0.0
    %v61 = vld [vmem:[#allocation2] sm:$0x1]
    %vm62 = vcmask 7168
    %v63 = vsel %vm62, %v60, 0.0
    %64 = vadd.xlane.f32.xlu0 %v63
    %v65 = vpop.xlane.xlu0 %64
    %v66 = vrot.slane %v65, 4
    %v67 = vadd.f32 %v65, %v66
    %v68 = vrot.slane %v67, 2
    %v69 = vadd.f32 %v67, %v68
    %v70 = vrot.slane %v69, 1
    %v71 = vadd.f32 %v69, %v70
    %s72 = vtos %v71
    %v73 = vstv %s72
    %v74 = vadd.f32 %v61, %v73
    %vm75 = vcmask 0
    %76 = vst.msk [vmem:[#allocation2] sm:$0x1] %vm75, %v74
    // Predicated region
    $region14: #{tpu_custom_call.1} parent=1 // pred_check
      %p77 = pneg %p12
    $region15: #{tpu_custom_call.1} parent=1 // pred_check_branch
      %79 = sbr.rel (%p77) target = $region17
    $region16: #{tpu_custom_call.1} parent=1 // pred_region
      %v80 = vld [vmem:[#allocation2] sm:$0x1]
      %v81 = vmul.f32 %v80, 0.125
      %82 = vst.msk [vmem:[#allocation3] sm:$0x1] %vm75, %v81
    $region17: #{tpu_custom_call.1} parent=1 // pred_fallthru
      _
    // Predicated region
    $region18: #{tpu_custom_call.1} parent=1 // pred_check
      _
    $region19: #{tpu_custom_call.1} parent=1 // pred_check_branch
      %84 = sbr.rel (0) target = $region21
    $region20: #{tpu_custom_call.1} parent=1 // pred_region
      %s86 = ssub.s32 16, 16
      %87 = vsyncadd [#allocation4], %s86
      %s89 = sshll.u32 [#allocation3], 4
      %s90 = int_to_ptr.vmem [resolvable:$true] %s89
      %92 = dma.vmem_to_hbm [thread:$0]  %s90, 16, %s2, [#allocation4]
    $region21: #{tpu_custom_call.1} parent=1 // pred_fallthru
      _
    // Predicated region
    $region22: #{tpu_custom_call.1} parent=1 // pred_check
      _
    $region23: #{tpu_custom_call.1} parent=1 // pred_check_branch
      %94 = sbr.rel (0) target = $region25
    $region24: #{tpu_custom_call.1} parent=1 // pred_region
      %95 = dma.done [#allocation4], 16
    $region25: #{tpu_custom_call.1} parent=1 // pred_fallthru
      _
    %96 = vsyncpa [#allocation4], 1

</llo_original>
